<compile_context>
chip_gen: v7x
topology: tpu7x:2x2x1
jax: 0.10.0
libtpu: 0.0.40
codegen_flags: <defaults>
</compile_context>

<pallas_src>
import jax
import jax.numpy as jnp
from jax.experimental import pallas as pl
from jax.experimental.pallas import tpu as pltpu

KERNEL = 3              # MaxPool2d(kernel_size=3) -> stride defaults to 3
TAPS = KERNEL * KERNEL  # 9 taps per pooling window

# Tile caps: input block = TAPS*TL*TS*4B ~= 2.4 MiB, double-buffered ~5 MiB.
_TL_MAX = 64            # sublane tile over L = N*C   (multiple of 8)
_TS_MAX = 1024          # lane   tile over S = Ho*Wo  (multiple of 128)


def _ceil_out(size: int) -> int:
    # PyTorch ceil_mode output size with padding=0, dilation=1, stride=KERNEL.
    return -(-(size - KERNEL) // KERNEL) + 1


def _maxpool_kernel(x_ref, o_ref):
    # x_ref: (TAPS, TL, TS) -- the 9 pooling taps for this (L, S) tile
    # o_ref: (TL, TS)
    x = x_ref[...]                      # single contiguous load of the block
    acc = x[0]                          # init from first tap (no -inf fill)
    for t in range(1, TAPS):
        acc = jnp.maximum(acc, x[t])    # 8 VPU maxes per output element
    o_ref[...] = acc                    # keep input dtype (max is exact)


def maxpool2d_ceil(x):
    """MaxPool2d(kernel_size=3, stride=3, ceil_mode=True) on an NCHW input."""
    if not jnp.issubdtype(x.dtype, jnp.floating):
        # TODO(synk): integer inputs (allowed by PyTorch) would need iinfo.min
        # padding instead of -inf; float-only here.
        raise TypeError("maxpool2d_ceil: floating-point input required")

    n, c, h, w = x.shape
    ho, wo = _ceil_out(h), _ceil_out(w)
    hp, wp = ho * KERNEL, wo * KERNEL
    l, s = n * c, ho * wo

    # Layout glue: pad the ragged right/bottom edge with -inf (never selected,
    # since with padding=0 every ceil-mode window starts inside the input) and
    # rearrange to tap-major (9, L, Ho*Wo).
    # TODO(synk): fuse this pad/transpose pass into the kernel's input DMA
    # (allow_input_fusion / in-kernel edge masking) to save one HBM pass.
    xp = jnp.pad(x.reshape(l, h, w), ((0, 0), (0, hp - h), (0, wp - w)),
                 constant_values=-jnp.inf)
    xk = (xp.reshape(l, ho, KERNEL, wo, KERNEL)
            .transpose(2, 4, 0, 1, 3)          # (dh, dw, L, Ho, Wo)
            .reshape(TAPS, l, s))

    tl = l if l <= _TL_MAX else _TL_MAX        # full dim or multiple of 8
    ts = s if s <= _TS_MAX else _TS_MAX        # full dim or multiple of 128
    grid = (pl.cdiv(l, tl), pl.cdiv(s, ts))

    out = pl.pallas_call(
        _maxpool_kernel,
        out_shape=jax.ShapeDtypeStruct((l, s), x.dtype),
        grid=grid,
        in_specs=[pl.BlockSpec((TAPS, tl, ts), lambda i, j: (0, i, j))],
        out_specs=pl.BlockSpec((tl, ts), lambda i, j: (i, j)),
        compiler_params=pltpu.CompilerParams(
            dimension_semantics=("parallel", "parallel"),
            vmem_limit_bytes=32 * 1024 * 1024),
    )(xk)

    # (L, S) -> NCHW: plain reshape, no transpose needed on the output side.
    return out.reshape(n, c, ho, wo)


def _ref_maxpool(x):
    # Pure-JAX reference matching PyTorch MaxPool2d(3, ceil_mode=True).
    n, c, h, w = x.shape
    ho, wo = _ceil_out(h), _ceil_out(w)
    hp, wp = ho * KERNEL, wo * KERNEL
    xp = jnp.pad(x, ((0, 0), (0, 0), (0, hp - h), (0, wp - w)),
                 constant_values=-jnp.inf)
    return xp.reshape(n, c, ho, KERNEL, wo, KERNEL).max(axis=(3, 5))


if __name__ == "__main__":
    key = jax.random.PRNGKey(0)
    k1, k2 = jax.random.split(key)

    # Small 4D NCHW input consistent with the module.
    x = jax.random.normal(k1, (2, 4, 16, 16), dtype=jnp.float32)
    out = jax.block_until_ready(maxpool2d_ceil(x))
    assert out.shape == (2, 4, 6, 6), out.shape
    assert jnp.allclose(out, _ref_maxpool(x)), "mismatch vs reference (16x16)"

    # The exact shape the original script reshapes to: (1, 1, 5, 5).
    x5 = jax.random.normal(k2, (1, 1, 5, 5), dtype=jnp.float32)
    out5 = jax.block_until_ready(maxpool2d_ceil(x5))
    assert out5.shape == (1, 1, 2, 2), out5.shape
    assert jnp.allclose(out5, _ref_maxpool(x5)), "mismatch vs reference (5x5)"

    print("KERNEL_OK")
</pallas_src>

<mosaic_0001>
module attributes {stable_mosaic.version = 11 : i64} {
  func.func @_maxpool_kernel(%arg0: i32, %arg1: i32, %arg2: memref<9x8x36xf32, #tpu.memory_space<vmem>>, %arg3: memref<8x36xf32, #tpu.memory_space<vmem>>) attributes {dimension_semantics = [#tpu.dimension_semantics<parallel>, #tpu.dimension_semantics<parallel>], iteration_bounds = array<i64: 1, 1>, scalar_prefetch = 0 : i64, scratch_operands = 0 : i64, tpu.core_type = #tpu.core_type<tc>, window_params = [{transform_indices = @transform_0, window_bounds = array<i64: 9, 8, 36>}, {transform_indices = @transform_1, window_bounds = array<i64: 8, 36>}]} {
    %c0 = arith.constant 0 : index
    %c0_0 = arith.constant 0 : index
    %c0_1 = arith.constant 0 : index
    %0 = vector.load %arg2[%c0, %c0_0, %c0_1] : memref<9x8x36xf32, #tpu.memory_space<vmem>>, vector<9x8x36xf32>
    %1 = vector.extract_strided_slice %0 {offsets = [0, 0, 0], sizes = [1, 8, 36], strides = [1, 1, 1]} : vector<9x8x36xf32> to vector<1x8x36xf32>
    %2 = vector.shape_cast %1 : vector<1x8x36xf32> to vector<8x36xf32>
    %3 = vector.extract_strided_slice %0 {offsets = [1, 0, 0], sizes = [1, 8, 36], strides = [1, 1, 1]} : vector<9x8x36xf32> to vector<1x8x36xf32>
    %4 = vector.shape_cast %3 : vector<1x8x36xf32> to vector<8x36xf32>
    %5 = arith.maximumf %2, %4 : vector<8x36xf32>
    %6 = vector.extract_strided_slice %0 {offsets = [2, 0, 0], sizes = [1, 8, 36], strides = [1, 1, 1]} : vector<9x8x36xf32> to vector<1x8x36xf32>
    %7 = vector.shape_cast %6 : vector<1x8x36xf32> to vector<8x36xf32>
    %8 = arith.maximumf %5, %7 : vector<8x36xf32>
    %9 = vector.extract_strided_slice %0 {offsets = [3, 0, 0], sizes = [1, 8, 36], strides = [1, 1, 1]} : vector<9x8x36xf32> to vector<1x8x36xf32>
    %10 = vector.shape_cast %9 : vector<1x8x36xf32> to vector<8x36xf32>
    %11 = arith.maximumf %8, %10 : vector<8x36xf32>
    %12 = vector.extract_strided_slice %0 {offsets = [4, 0, 0], sizes = [1, 8, 36], strides = [1, 1, 1]} : vector<9x8x36xf32> to vector<1x8x36xf32>
    %13 = vector.shape_cast %12 : vector<1x8x36xf32> to vector<8x36xf32>
    %14 = arith.maximumf %11, %13 : vector<8x36xf32>
    %15 = vector.extract_strided_slice %0 {offsets = [5, 0, 0], sizes = [1, 8, 36], strides = [1, 1, 1]} : vector<9x8x36xf32> to vector<1x8x36xf32>
    %16 = vector.shape_cast %15 : vector<1x8x36xf32> to vector<8x36xf32>
    %17 = arith.maximumf %14, %16 : vector<8x36xf32>
    %18 = vector.extract_strided_slice %0 {offsets = [6, 0, 0], sizes = [1, 8, 36], strides = [1, 1, 1]} : vector<9x8x36xf32> to vector<1x8x36xf32>
    %19 = vector.shape_cast %18 : vector<1x8x36xf32> to vector<8x36xf32>
    %20 = arith.maximumf %17, %19 : vector<8x36xf32>
    %21 = vector.extract_strided_slice %0 {offsets = [7, 0, 0], sizes = [1, 8, 36], strides = [1, 1, 1]} : vector<9x8x36xf32> to vector<1x8x36xf32>
    %22 = vector.shape_cast %21 : vector<1x8x36xf32> to vector<8x36xf32>
    %23 = arith.maximumf %20, %22 : vector<8x36xf32>
    %24 = vector.extract_strided_slice %0 {offsets = [8, 0, 0], sizes = [1, 8, 36], strides = [1, 1, 1]} : vector<9x8x36xf32> to vector<1x8x36xf32>
    %25 = vector.shape_cast %24 : vector<1x8x36xf32> to vector<8x36xf32>
    %26 = arith.maximumf %23, %25 : vector<8x36xf32>
    %c0_2 = arith.constant 0 : index
    %c0_3 = arith.constant 0 : index
    %27 = vector.load %arg3[%c0_2, %c0_3] : memref<8x36xf32, #tpu.memory_space<vmem>>, vector<8x36xf32>
    tpu.vector_store %arg3[%c0_2, %c0_3], %26 {strides = array<i32>} : memref<8x36xf32, #tpu.memory_space<vmem>>, vector<8x36xf32>,
    return
  }
  func.func @transform_0(%arg0: i32, %arg1: i32) -> (i32, i32, i32) {
    %c0_i32 = arith.constant 0 : i32
    %c0_i32_0 = arith.constant 0 : i32
    return %c0_i32, %arg0, %arg1 : i32, i32, i32
  }
  func.func @transform_1(%arg0: i32, %arg1: i32) -> (i32, i32) {
    %c0_i32 = arith.constant 0 : i32
    return %arg0, %arg1 : i32, i32
  }
}

</mosaic_0001>

<llo_original>
// kernel: tpu_custom_call.1
$region0: #{tpu_custom_call.1}
  #allocation0 [shape = 'u32[]', space=smem, size = 0x4, offset = 0x4, fixed_abs, tag = 'smem constant byte address 0x4 - core index']
  #allocation1 [shape = 'u32[144,128]{1,0:T(1,128)}', space=vmem, size = 0x12000, scoped, tag = 'internal scratch']
  %s0 = inlined_call_operand.hbm [shape: f32[9,8,36], index: 0, kind: input, shape index: {}]
  %s1 = inlined_call_operand.hbm [shape: f32[8,36], index: 1, kind: output, shape index: {}]
  %s2 = sld [smem:[#allocation0]]
  $region18: #{tpu_custom_call.1} parent=0
    _
  %s4 = ssub.s32 1, %s2
  %s5 = scalar_select 0, %s4, %s2
  $region1: #{tpu_custom_call.1} parent=0
    #allocation2 [shape = 'u8[36864]{0}', space=vmem, size = 0x9000, scoped, tag = 'input window, operand 0, single buffered']
    #allocation3 [shape = 's32[1]{0}', space=sflag, size = 0x4, scoped, tag = 'scoped memory for tpu_custom_call.1']
    #allocation4 [shape = 's32[1]{0}', space=sflag, size = 0x4, scoped, tag = 'scoped memory for tpu_custom_call.1']
    #allocation5 [shape = 'u8[4096]{0}', space=vmem, size = 0x1000, scoped, tag = 'output window, operand 0, single buffered']
    %6 = vsyncpa [#allocation3], 0
    %7 = vsyncpa [#allocation4], 0
    // Predicated region
    $region2: #{tpu_custom_call.1} parent=1 // pred_check
      _
    $region3: #{tpu_custom_call.1} parent=1 // pred_check_branch
      %9 = sbr.rel (0) target = $region5
    $region4: #{tpu_custom_call.1} parent=1 // pred_region
      %s11 = ssub.s32 1152, 1152
      %12 = vsyncadd [#allocation3], %s11
      %s13 = sshll.u32 [#allocation2], 4
      %s14 = int_to_ptr.vmem [resolvable:$true] %s13
      %19 = dma.hbm_to_vmem [thread:$0]  %s0, 1152, %s14, [#allocation3], 128, 128, 8
    $region5: #{tpu_custom_call.1} parent=1 // pred_fallthru
      _
    // Predicated region
    $region6: #{tpu_custom_call.1} parent=1 // pred_check
      _
    $region7: #{tpu_custom_call.1} parent=1 // pred_check_branch
      %21 = sbr.rel (0) target = $region9
    $region8: #{tpu_custom_call.1} parent=1 // pred_region
      %22 = dma.done [#allocation3], 1152
    $region9: #{tpu_custom_call.1} parent=1 // pred_fallthru
      _
    %v23 = vld [vmem:[#allocation2] sm:$0xff]
    %v24 = vld [vmem:[#allocation2 + $0x8] sm:$0xff]
    %v25 = vld [vmem:[#allocation2 + $0x10] sm:$0xff]
    %v26 = vld [vmem:[#allocation2 + $0x18] sm:$0xff]
    %v27 = vld [vmem:[#allocation2 + $0x20] sm:$0xff]
    %v28 = vld [vmem:[#allocation2 + $0x28] sm:$0xff]
    %v29 = vld [vmem:[#allocation2 + $0x30] sm:$0xff]
    %v30 = vld [vmem:[#allocation2 + $0x38] sm:$0xff]
    %v31 = vld [vmem:[#allocation2 + $0x40] sm:$0xff]
    %v32 = vmax.f32 %v23, %v24
    %v33 = vmax.f32 %v32, %v25
    %v34 = vmax.f32 %v33, %v26
    %v35 = vmax.f32 %v34, %v27
    %v36 = vmax.f32 %v35, %v28
    %v37 = vmax.f32 %v36, %v29
    %v38 = vmax.f32 %v37, %v30
    %v39 = vmax.f32 %v38, %v31
    %vm40 = vcmask 293888
    %41 = vst.msk [vmem:[#allocation5] sm:$0xff] %vm40, %v39
    // Predicated region
    $region10: #{tpu_custom_call.1} parent=1 // pred_check
      _
    $region11: #{tpu_custom_call.1} parent=1 // pred_check_branch
      %43 = sbr.rel (0) target = $region13
    $region12: #{tpu_custom_call.1} parent=1 // pred_region
      %s45 = ssub.s32 128, 128
      %46 = vsyncadd [#allocation4], %s45
      %s48 = sshll.u32 [#allocation5], 4
      %s49 = int_to_ptr.vmem [resolvable:$true] %s48
      %51 = dma.vmem_to_hbm [thread:$0]  %s49, 128, %s1, [#allocation4]
    $region13: #{tpu_custom_call.1} parent=1 // pred_fallthru
      _
    // Predicated region
    $region14: #{tpu_custom_call.1} parent=1 // pred_check
      _
    $region15: #{tpu_custom_call.1} parent=1 // pred_check_branch
      %53 = sbr.rel (0) target = $region17
    $region16: #{tpu_custom_call.1} parent=1 // pred_region
      %54 = dma.done [#allocation4], 128
    $region17: #{tpu_custom_call.1} parent=1 // pred_fallthru
      _
    %55 = vsyncpa [#allocation3], 1
    %56 = vsyncpa [#allocation4], 1

</llo_original>
